<compile_context>
chip_gen: v7x
topology: tpu7x:2x2x1
jax: 0.10.0
libtpu: 0.0.40
codegen_flags: <defaults>
</compile_context>

<pallas_src>
import jax
import jax.numpy as jnp
from jax.experimental import pallas as pl
from jax.experimental.pallas import tpu as pltpu


_COL_CANDIDATES = (2048, 1024, 512, 256, 128)


def _identity_kernel(x_ref, o_ref):
    # Pure ref-to-ref copy of the current tile: the only vector work is the
    # store slot (important on v5e which has a single vst slot).
    o_ref[...] = x_ref[...]


def _vmem_capacity_bytes() -> int:
    """Per-core VMEM capacity; conservative fallback if the query fails."""
    try:
        return int(pltpu.get_tpu_info().vmem_capacity_bytes)
    except Exception:
        return 64 * 1024 * 1024  # v7x per-TensorCore capacity (the smallest)


def _pick_row_tile(rows: int, row_budget: int, sublane: int) -> int:
    """Largest sublane-aligned row tile <= budget, preferring exact divisors."""
    row_budget = max(1, min(rows, row_budget))
    if row_budget >= rows:
        return rows
    if rows <= sublane:
        return rows
    t = (row_budget // sublane) * sublane
    while t >= sublane:
        if rows % t == 0:
            return t  # aligned divisor: no ragged final block, no masked vst
        t -= sublane
    # No aligned divisor within budget: accept a ragged (padded) final block.
    return max(sublane, (row_budget // sublane) * sublane)


def _lane_dense_copy(x2d: jax.Array) -> jax.Array:
    """Identity copy of a (rows, cols) array, cols a multiple of 128."""
    rows, cols = x2d.shape
    # TODO(synk): itemsize-based tiling would need adjusting for sub-byte
    # dtypes (int4/fp4) if those ever flow through.
    itemsize = max(1, jnp.dtype(x2d.dtype).itemsize)
    # Sublane packing multiple: 8 for 32-bit, 16 for bf16, 32 for int8/fp8.
    sublane = max(8, 32 // itemsize)

    vmem_cap = _vmem_capacity_bytes()
    # Live VMEM = 2 double-buffered copies of (input tile + output tile)
    # = 4 x tile bytes.  Keep that <= ~half of physical VMEM, cap tiles at
    # 8 MiB (already ~86% of copy roofline on v6e, and the right size for
    # v7x's faster HBM / smaller VMEM).
    tile_budget_bytes = min(8 << 20, max(1 << 20, vmem_cap // 8))
    row_budget = max(1, tile_budget_bytes // (cols * itemsize))
    row_tile = _pick_row_tile(rows, row_budget, sublane)
    grid_rows = pl.cdiv(rows, row_tile)

    # If one tile covers everything, split it so both v7x TensorCores get work
    # (HBM is shared so bulk BW doesn't double, but DMA issue overlaps).
    if grid_rows == 1 and rows >= 2 * sublane:
        half = max(sublane, ((rows // 2) // sublane) * sublane)
        t = half
        while t >= sublane and rows % t != 0:
            t -= sublane
        row_tile = t if t >= sublane else half
        grid_rows = pl.cdiv(rows, row_tile)

    # Explicit VMEM limit: covers the live footprint with headroom, never
    # exceeds physical capacity.  (v5e's 16 MiB *default* scoped limit would
    # otherwise be exactly hit by 4 x 4 MiB tiles.)
    live_bytes = 4 * row_tile * cols * itemsize
    vmem_limit = int(min(vmem_cap, max(32 << 20, live_bytes + (8 << 20))))

    return pl.pallas_call(
        _identity_kernel,
        out_shape=jax.ShapeDtypeStruct((rows, cols), x2d.dtype),
        grid=(grid_rows,),
        in_specs=[pl.BlockSpec((row_tile, cols), lambda i: (i, 0))],
        out_specs=pl.BlockSpec((row_tile, cols), lambda i: (i, 0)),
        compiler_params=pltpu.CompilerParams(
            dimension_semantics=("parallel",),
            vmem_limit_bytes=vmem_limit,
        ),
    )(x2d)


def mid_forward(x: jax.Array, use_pallas: bool = True) -> jax.Array:
    """Forward of the (empty) Mid block: identity on the activation.

    `use_pallas=False` is the zero-cost implementation (`return x`); the
    Pallas path runs a near-roofline HBM copy purely to exercise the kernel.
    """
    if not use_pallas:
        return x
    total = x.size
    if total == 0:
        return x

    cols = next((c for c in _COL_CANDIDATES if total % c == 0), None)
    if cols is not None:
        rows = total // cols
        return _lane_dense_copy(x.reshape(rows, cols)).reshape(x.shape)

    # Element count not a multiple of 128: lane-dense kernel on the aligned
    # prefix, small tail passed through untouched in plain XLA.
    flat = x.reshape(-1)
    main = (total // 128) * 128
    if main == 0:
        return x  # tiny tensor; a kernel launch is pure overhead
    main_cols = next(c for c in _COL_CANDIDATES if main % c == 0)
    head = _lane_dense_copy(flat[:main].reshape(main // main_cols, main_cols))
    return jnp.concatenate([head.reshape(-1), flat[main:]]).reshape(x.shape)


class Mid:
    """Mirror of the (stub) PyTorch Mid module. No parameters, no compute.

    The exact (and fastest) forward is `return x`; set use_pallas_copy=False
    for production.  The default keeps the Pallas identity-copy kernel so the
    kernel path is exercised.
    """

    def __init__(self, config=None, use_pallas_copy: bool = True):
        # Reference __init__ is `pass`: nothing to initialize.
        self.config = config
        self.use_pallas_copy = use_pallas_copy

    def __call__(self, x: jax.Array) -> jax.Array:
        # Reference forward is `pass` (no-op): identity on the activation.
        if not self.use_pallas_copy:
            return x
        return mid_forward(x, use_pallas=True)


if __name__ == "__main__":
    key = jax.random.PRNGKey(0)
    # Small NCHW activation consistent with a DiT mid-block feature map.
    x = jax.random.normal(key, (2, 4, 16, 16), dtype=jnp.float32)

    block = Mid(config=None)            # Pallas kernel path
    y = jax.block_until_ready(block(x))
    assert y.shape == x.shape and y.dtype == x.dtype
    assert bool(jnp.all(y == x))

    # Zero-cost path (the honest implementation of an empty module).
    block_fast = Mid(config=None, use_pallas_copy=False)
    y_fast = jax.block_until_ready(block_fast(x))
    assert bool(jnp.all(y_fast == x))

    # Non-multiple-of-128 element count: aligned prefix through the kernel,
    # tail through plain XLA.
    x_odd = jax.random.normal(key, (2, 3, 91), dtype=jnp.float32)
    y_odd = jax.block_until_ready(mid_forward(x_odd))
    assert y_odd.shape == x_odd.shape and bool(jnp.all(y_odd == x_odd))

    print("KERNEL_OK")
</pallas_src>

<mosaic_0001>
module attributes {stable_mosaic.version = 11 : i64} {
  func.func @_identity_kernel(%arg0: i32, %arg1: memref<1x2048xf32, #tpu.memory_space<vmem>>, %arg2: memref<1x2048xf32, #tpu.memory_space<vmem>>) attributes {dimension_semantics = [#tpu.dimension_semantics<parallel>], iteration_bounds = array<i64: 1>, scalar_prefetch = 0 : i64, scratch_operands = 0 : i64, tpu.core_type = #tpu.core_type<tc>, window_params = [{transform_indices = @transform_0, window_bounds = array<i64: 1, 2048>}, {transform_indices = @transform_1, window_bounds = array<i64: 1, 2048>}]} {
    %c0 = arith.constant 0 : index
    %c0_0 = arith.constant 0 : index
    %0 = vector.load %arg1[%c0, %c0_0] : memref<1x2048xf32, #tpu.memory_space<vmem>>, vector<1x2048xf32>
    %c0_1 = arith.constant 0 : index
    %c0_2 = arith.constant 0 : index
    %1 = vector.load %arg2[%c0_1, %c0_2] : memref<1x2048xf32, #tpu.memory_space<vmem>>, vector<1x2048xf32>
    tpu.vector_store %arg2[%c0_1, %c0_2], %0 {strides = array<i32>} : memref<1x2048xf32, #tpu.memory_space<vmem>>, vector<1x2048xf32>,
    return
  }
  func.func @transform_0(%arg0: i32) -> (i32, i32) {
    %c0_i32 = arith.constant 0 : i32
    %c0_i32_0 = arith.constant 0 : i32
    return %arg0, %c0_i32 : i32, i32
  }
  func.func @transform_1(%arg0: i32) -> (i32, i32) {
    %c0_i32 = arith.constant 0 : i32
    %c0_i32_0 = arith.constant 0 : i32
    return %arg0, %c0_i32 : i32, i32
  }
}

</mosaic_0001>

<llo_original>
// kernel: tpu_custom_call.1
$region0: #{tpu_custom_call.1}
  #allocation0 [shape = 'u32[]', space=smem, size = 0x4, offset = 0x4, fixed_abs, tag = 'smem constant byte address 0x4 - core index']
  #allocation1 [shape = 'u32[144,128]{1,0:T(1,128)}', space=vmem, size = 0x12000, scoped, tag = 'internal scratch']
  %s0 = inlined_call_operand.hbm [shape: f32[1,2048], index: 0, kind: input, shape index: {}]
  %s1 = inlined_call_operand.hbm [shape: f32[1,2048], index: 1, kind: output, shape index: {}]
  %s2 = sld [smem:[#allocation0]]
  $region18: #{tpu_custom_call.1} parent=0
    _
  %s4 = ssub.s32 1, %s2
  %s5 = scalar_select 0, %s4, %s2
  $region1: #{tpu_custom_call.1} parent=0
    #allocation2 [shape = 'u8[8192]{0}', space=vmem, size = 0x2000, scoped, tag = 'input window, operand 0, single buffered']
    #allocation3 [shape = 's32[1]{0}', space=sflag, size = 0x4, scoped, tag = 'scoped memory for tpu_custom_call.1']
    #allocation4 [shape = 's32[1]{0}', space=sflag, size = 0x4, scoped, tag = 'scoped memory for tpu_custom_call.1']
    #allocation5 [shape = 'u8[8192]{0}', space=vmem, size = 0x2000, scoped, tag = 'output window, operand 0, single buffered']
    %6 = vsyncpa [#allocation3], 0
    %7 = vsyncpa [#allocation4], 0
    // Predicated region
    $region2: #{tpu_custom_call.1} parent=1 // pred_check
      _
    $region3: #{tpu_custom_call.1} parent=1 // pred_check_branch
      %9 = sbr.rel (0) target = $region5
    $region4: #{tpu_custom_call.1} parent=1 // pred_region
      %s11 = ssub.s32 256, 256
      %12 = vsyncadd [#allocation3], %s11
      %s14 = sshll.u32 [#allocation2], 4
      %s15 = int_to_ptr.vmem [resolvable:$true] %s14
      %17 = dma.hbm_to_vmem [thread:$0]  %s0, 256, %s15, [#allocation3]
    $region5: #{tpu_custom_call.1} parent=1 // pred_fallthru
      _
    // Predicated region
    $region6: #{tpu_custom_call.1} parent=1 // pred_check
      _
    $region7: #{tpu_custom_call.1} parent=1 // pred_check_branch
      %19 = sbr.rel (0) target = $region9
    $region8: #{tpu_custom_call.1} parent=1 // pred_region
      %20 = dma.done [#allocation3], 256
    $region9: #{tpu_custom_call.1} parent=1 // pred_fallthru
      _
    %v21 = vld [vmem:[#allocation2] sm:$0xff]
    %v22 = vld [vmem:[#allocation2 + $0x8] sm:$0xff]
    %23 = vst [vmem:[#allocation5] sm:$0xff] %v21
    %24 = vst [vmem:[#allocation5 + $0x8] sm:$0xff] %v22
    // Predicated region
    $region10: #{tpu_custom_call.1} parent=1 // pred_check
      _
    $region11: #{tpu_custom_call.1} parent=1 // pred_check_branch
      %26 = sbr.rel (0) target = $region13
    $region12: #{tpu_custom_call.1} parent=1 // pred_region
      %s28 = ssub.s32 256, 256
      %29 = vsyncadd [#allocation4], %s28
      %s31 = sshll.u32 [#allocation5], 4
      %s32 = int_to_ptr.vmem [resolvable:$true] %s31
      %34 = dma.vmem_to_hbm [thread:$0]  %s32, 256, %s1, [#allocation4]
    $region13: #{tpu_custom_call.1} parent=1 // pred_fallthru
      _
    // Predicated region
    $region14: #{tpu_custom_call.1} parent=1 // pred_check
      _
    $region15: #{tpu_custom_call.1} parent=1 // pred_check_branch
      %36 = sbr.rel (0) target = $region17
    $region16: #{tpu_custom_call.1} parent=1 // pred_region
      %37 = dma.done [#allocation4], 256
    $region17: #{tpu_custom_call.1} parent=1 // pred_fallthru
      _
    %38 = vsyncpa [#allocation3], 1
    %39 = vsyncpa [#allocation4], 1

</llo_original>
